<compile_context>
chip_gen: v5e
topology: v5e:2x2
jax: 0.10.0
libtpu: 0.0.40
codegen_flags: <defaults>
</compile_context>

<pallas_src>
import jax
import jax.numpy as jnp
import numpy as np
from jax import lax
from jax.experimental import pallas as pl
from jax.experimental.pallas import tpu as pltpu


_NEG = -1e30  # finite "minus infinity": avoids (-inf)-(-inf) NaNs in the online max


def _round_up(a, b):
    return ((a + b - 1) // b) * b


def _cdiv(a, b):
    return (a + b - 1) // b


def _make_kernel(tile_g, num_chunks):
    def kernel(batch_ref, x_ref, wa_ref, ba_ref, wp_ref, bp_ref,
               out_ref, m_sc, l_sc, acc_sc):
        # batch_ref: [1, Tn] int32   x_ref: [Tn, C]   wa_ref: [1, C]  ba_ref: [1, 1]
        # wp_ref:    [C, O]          bp_ref: [1, O]   out_ref: [num_chunks, Tg, O]
        # scratch:   m_sc/l_sc [num_chunks, Tg, 1] f32, acc_sc [num_chunks, Tg, C] f32
        n_idx = pl.program_id(0)

        @pl.when(n_idx == 0)
        def _():
            m_sc[...] = jnp.full_like(m_sc, _NEG)
            l_sc[...] = jnp.zeros_like(l_sc)
            acc_sc[...] = jnp.zeros_like(acc_sc)

        x = x_ref[...]                                   # [Tn, C], native dtype
        batch_row = batch_ref[...]                       # [1, Tn] int32

        # Attention logits, emitted directly in lane-dense [1, Tn] orientation on the
        # MXU ([1,C] x [Tn,C]^T) -- no cross-lane/sublane relayout needed.
        a_row = lax.dot_general(wa_ref[...], x, (((1,), (1,)), ((), ())),
                                preferred_element_type=jnp.float32) + ba_ref[...]  # [1, Tn]

        def update_chunk(c):
            # Membership of this tile's nodes in this chunk's graphs: [Tg,1] column of
            # graph ids broadcast against the [1,Tn] batch row (no [Tg,Tn] iota).
            seg_col = c * tile_g + lax.broadcasted_iota(jnp.int32, (tile_g, 1), 0)
            member = batch_row == seg_col                                      # [Tg, Tn]

            m_old = m_sc[c]                                                    # [Tg, 1]
            tile_max = jnp.max(jnp.where(member, a_row, _NEG), axis=1, keepdims=True)
            m_new = jnp.maximum(m_old, tile_max)                               # [Tg, 1]
            corr = jnp.exp(m_old - m_new)                                      # Tg exps only

            # Per-node max (each node belongs to exactly one graph): one sublane (XLU)
            # reduce, then a single row of exps (Tn, not Tg*Tn).  Nodes whose graph is
            # outside this chunk keep the _NEG sentinel -> exp(_NEG) == 0, no overflow.
            m_node = jnp.max(jnp.where(member, m_new, _NEG), axis=0, keepdims=True)  # [1,Tn]
            p_row = jnp.exp(jnp.where(m_node > 0.5 * _NEG, a_row - m_node, _NEG))    # [1,Tn]
            p = jnp.where(member, p_row, 0.0)                                  # VPU select

            l_sc[c] = corr * l_sc[c] + jnp.sum(p, axis=1, keepdims=True)
            # Softmax numerators folded into the pooling matmul: the MXU absorbs the
            # per-node scaling for free (no [N,C] VPU rescale of x).
            acc_sc[c] = corr * acc_sc[c] + jnp.dot(
                p.astype(x.dtype), x, preferred_element_type=jnp.float32)      # [Tg, C]
            m_sc[c] = m_new

        if num_chunks == 1:
            update_chunk(0)
        else:
            def body(c, carry):
                update_chunk(c)
                return carry
            lax.fori_loop(0, num_chunks, body, 0)

        @pl.when(n_idx == pl.num_programs(0) - 1)
        def _():
            def finalize_chunk(c):
                l = l_sc[c]
                # Exact reciprocal on the [Tg,1] sums (G reciprocals, not N); guard empty
                # graphs (l == 0) so they produce pooled == 0 like the segment-op reference.
                inv_l = jnp.where(l > 0.0, pl.reciprocal(l, approx=False), 0.0)
                pooled = acc_sc[c] * inv_l                                     # [Tg, C]
                out = jnp.dot(pooled.astype(wp_ref.dtype), wp_ref[...],
                              preferred_element_type=jnp.float32) + bp_ref[...]  # [Tg, O]
                out_ref[c] = out.astype(out_ref.dtype)

            if num_chunks == 1:
                finalize_chunk(0)
            else:
                def fbody(c, carry):
                    finalize_chunk(c)
                    return carry
                lax.fori_loop(0, num_chunks, fbody, 0)

    return kernel


def triple_pattern_pooling(x, edge_index, edge_attr, batch, num_graphs,
                           w_attn, b_attn, w_proj, b_proj):
    """Pallas port of TriplePatternPooling.forward.

    w_attn: [1, C], b_attn: [1], w_proj: [O, C], b_proj: [O] (nn.Linear layout).
    Pass x in bf16 to halve the dominant HBM stream (matmuls still accumulate in f32).
    """
    # TODO(synk): the reference forward print()s edge_index/batch; debug prints omitted.
    del edge_index, edge_attr
    N, C = x.shape
    O = w_proj.shape[0]
    dt = x.dtype
    itemsize = jnp.dtype(dt).itemsize

    # --- graph chunking: all graphs resident in VMEM scratch, <=128 per chunk. ---
    tile_g = min(_round_up(max(int(num_graphs), 1), 8), 128)
    g_pad = _round_up(int(num_graphs), tile_g)
    num_chunks = g_pad // tile_g

    # --- node tile sized from the chip's VMEM (conservative fallback = v7x 64 MiB). ---
    try:
        vmem_cap = int(pltpu.get_tpu_info().vmem_capacity_bytes)
    except Exception:
        vmem_cap = 64 << 20
    budget = min(vmem_cap // 3, 48 << 20)

    fixed = (num_chunks * tile_g * (C + 2) * 4            # acc/m/l scratch (f32)
             + num_chunks * tile_g * O * 4                # resident output block
             + (C * O + 2 * C) * itemsize + 2 * O * 4)    # weights / biases
    per_row = (2 * C * itemsize                           # double-buffered x
               + 2 * 4                                    # double-buffered batch ids
               + 6 * tile_g * 4)                          # [Tg,Tn] elementwise temporaries
    t_max = max((budget - fixed) // per_row, 128)
    t_max = int(min(t_max, 8192))
    t_max = max((t_max // 128) * 128, 128)

    n_tiles = _cdiv(max(N, 1), t_max)
    if n_tiles == 1:
        tile_n = _round_up(max(N, 8), 8)                  # full-extent block (no 128 req.)
    else:
        tile_n = _round_up(_cdiv(N, n_tiles), 128)        # lane-legal multiple of 128
    n_pad = tile_n * n_tiles

    est = fixed + per_row * tile_n
    vmem_limit = int(min(vmem_cap * 9 // 10, max(32 << 20, 2 * est)))

    x_p = x if n_pad == N else jnp.pad(x, ((0, n_pad - N), (0, 0)))
    batch_p = batch.astype(jnp.int32)
    if n_pad != N:
        batch_p = jnp.pad(batch_p, (0, n_pad - N), constant_values=-1)  # never matches a graph
    batch2 = batch_p.reshape(1, n_pad)

    wa = w_attn.reshape(1, C).astype(dt)        # [1, C]  (row-oriented; no transpose)
    wp = jnp.transpose(w_proj).astype(dt)       # [C, O]
    ba = b_attn.reshape(1, 1).astype(jnp.float32)
    bp = b_proj.reshape(1, O).astype(jnp.float32)

    out = pl.pallas_call(
        _make_kernel(tile_g, num_chunks),
        out_shape=jax.ShapeDtypeStruct((num_chunks, tile_g, O), dt),
        grid_spec=pltpu.PrefetchScalarGridSpec(
            num_scalar_prefetch=0,
            grid=(n_tiles,),
            in_specs=[
                pl.BlockSpec((1, tile_n), lambda n: (0, n)),   # batch ids
                pl.BlockSpec((tile_n, C), lambda n: (n, 0)),   # node features (streamed once)
                pl.BlockSpec((1, C), lambda n: (0, 0)),        # attn weight
                pl.BlockSpec((1, 1), lambda n: (0, 0)),        # attn bias
                pl.BlockSpec((C, O), lambda n: (0, 0)),        # proj weight
                pl.BlockSpec((1, O), lambda n: (0, 0)),        # proj bias
            ],
            out_specs=pl.BlockSpec((num_chunks, tile_g, O), lambda n: (0, 0, 0)),
            scratch_shapes=[
                pltpu.VMEM((num_chunks, tile_g, 1), jnp.float32),   # running max
                pltpu.VMEM((num_chunks, tile_g, 1), jnp.float32),   # running sum
                pltpu.VMEM((num_chunks, tile_g, C), jnp.float32),   # running weighted acc
            ],
        ),
        compiler_params=pltpu.CompilerParams(
            dimension_semantics=("arbitrary",),
            vmem_limit_bytes=vmem_limit),
    )(batch2, x_p, wa, ba, wp, bp)
    return out.reshape(num_chunks * tile_g, O)[:num_graphs]


def _reference(x, batch, num_graphs, w_attn, b_attn, w_proj, b_proj):
    a = x @ w_attn.T + b_attn                             # [N, 1]
    seg_max = jax.ops.segment_max(a[:, 0], batch, num_segments=num_graphs)
    e = jnp.exp(a[:, 0] - seg_max[batch])
    den = jax.ops.segment_sum(e, batch, num_segments=num_graphs)
    w = (e / den[batch])[:, None]
    pooled = jax.ops.segment_sum(w * x, batch, num_segments=num_graphs)
    return pooled @ w_proj.T + b_proj


if __name__ == "__main__":
    in_channels, out_channels = 32, 16

    key = jax.random.PRNGKey(0)
    k_x, k_wa, k_ba, k_wp, k_bp, k_x2, k_b2, k_x3, k_b3 = jax.random.split(key, 9)

    w_attn = jax.random.normal(k_wa, (1, in_channels), dtype=jnp.float32) * 0.1
    b_attn = jax.random.normal(k_ba, (1,), dtype=jnp.float32) * 0.1
    w_proj = jax.random.normal(k_wp, (out_channels, in_channels), dtype=jnp.float32) * 0.1
    b_proj = jax.random.normal(k_bp, (out_channels,), dtype=jnp.float32) * 0.1

    # dummy graph connectivity (unused by the compute, kept for signature parity)
    edge_index = jnp.array([[0, 1, 2, 4, 5], [1, 2, 3, 5, 6]], dtype=jnp.int32)
    edge_attr = jnp.zeros((5, 1), dtype=jnp.float32)

    # --- small case ---
    num_nodes, num_graphs = 8, 2
    x = jax.random.normal(k_x, (num_nodes, in_channels), dtype=jnp.float32)
    batch = jnp.array([0, 0, 0, 0, 1, 1, 1, 1], dtype=jnp.int32)
    out = triple_pattern_pooling(x, edge_index, edge_attr, batch, num_graphs,
                                 w_attn, b_attn, w_proj, b_proj)
    out = jax.block_until_ready(out)
    ref = _reference(x, batch, num_graphs, w_attn, b_attn, w_proj, b_proj)
    np.testing.assert_allclose(np.asarray(out), np.asarray(ref), rtol=1e-5, atol=1e-5)

    # --- large N: exercises the multi-tile online segment softmax + padding path ---
    n2, g2 = 20000, 5
    x2 = jax.random.normal(k_x2, (n2, in_channels), dtype=jnp.float32)
    batch2 = jax.random.randint(k_b2, (n2,), 0, g2).astype(jnp.int32)
    out2 = triple_pattern_pooling(x2, edge_index, edge_attr, batch2, g2,
                                  w_attn, b_attn, w_proj, b_proj)
    out2 = jax.block_until_ready(out2)
    ref2 = _reference(x2, batch2, g2, w_attn, b_attn, w_proj, b_proj)
    np.testing.assert_allclose(np.asarray(out2), np.asarray(ref2), rtol=1e-3, atol=5e-4)

    # --- many graphs (>128): exercises the in-kernel graph-chunk loop, x still single-pass ---
    n3, g3 = 4096, 200
    x3 = jax.random.normal(k_x3, (n3, in_channels), dtype=jnp.float32)
    batch3 = jax.random.randint(k_b3, (n3,), 0, g3).astype(jnp.int32)
    out3 = triple_pattern_pooling(x3, edge_index, edge_attr, batch3, g3,
                                  w_attn, b_attn, w_proj, b_proj)
    out3 = jax.block_until_ready(out3)
    ref3 = _reference(x3, batch3, g3, w_attn, b_attn, w_proj, b_proj)
    np.testing.assert_allclose(np.asarray(out3), np.asarray(ref3), rtol=1e-3, atol=5e-4)

    print("KERNEL_OK")
</pallas_src>

<mosaic_0001>
module attributes {stable_mosaic.version = 11 : i64} {
  func.func @kernel(%arg0: i32, %arg1: memref<1x8xi32, #tpu.memory_space<vmem>>, %arg2: memref<8x32xf32, #tpu.memory_space<vmem>>, %arg3: memref<1x32xf32, #tpu.memory_space<vmem>>, %arg4: memref<1x1xf32, #tpu.memory_space<vmem>>, %arg5: memref<32x16xf32, #tpu.memory_space<vmem>>, %arg6: memref<1x16xf32, #tpu.memory_space<vmem>>, %arg7: memref<1x8x16xf32, #tpu.memory_space<vmem>>, %arg8: memref<1x8x1xf32, #tpu.memory_space<vmem>>, %arg9: memref<1x8x1xf32, #tpu.memory_space<vmem>>, %arg10: memref<1x8x32xf32, #tpu.memory_space<vmem>>) attributes {dimension_semantics = [#tpu.dimension_semantics<arbitrary>], iteration_bounds = array<i64: 1>, scalar_prefetch = 0 : i64, scratch_operands = 3 : i64, tpu.core_type = #tpu.core_type<tc>, window_params = [{transform_indices = @transform_0, window_bounds = array<i64: 1, 8>}, {transform_indices = @transform_1, window_bounds = array<i64: 8, 32>}, {pipeline_mode = #tpu.pipeline_mode<synchronous>, transform_indices = @transform_2, window_bounds = array<i64: 1, 32>}, {pipeline_mode = #tpu.pipeline_mode<synchronous>, transform_indices = @transform_3, window_bounds = array<i64: 1, 1>}, {pipeline_mode = #tpu.pipeline_mode<synchronous>, transform_indices = @transform_4, window_bounds = array<i64: 32, 16>}, {pipeline_mode = #tpu.pipeline_mode<synchronous>, transform_indices = @transform_5, window_bounds = array<i64: 1, 16>}, {pipeline_mode = #tpu.pipeline_mode<synchronous>, transform_indices = @transform_6, window_bounds = array<i64: 1, 8, 16>}]} {
    %c0_i32 = arith.constant 0 : i32
    %0 = arith.cmpi eq, %arg0, %c0_i32 : i32
    %1 = arith.extui %0 : i1 to i32
    %c0_i32_0 = arith.constant 0 : i32
    %2 = arith.cmpi ne, %1, %c0_i32_0 : i32
    scf.if %2 {
      %cst_38 = arith.constant -1.000000e+30 : f32
      %67 = vector.broadcast %cst_38 : f32 to vector<1x8x1xf32>
      %c0_39 = arith.constant 0 : index
      %c0_40 = arith.constant 0 : index
      %c0_41 = arith.constant 0 : index
      %68 = vector.load %arg8[%c0_39, %c0_40, %c0_41] : memref<1x8x1xf32, #tpu.memory_space<vmem>>, vector<1x8x1xf32>
      tpu.vector_store %arg8[%c0_39, %c0_40, %c0_41], %67 {strides = array<i32>} : memref<1x8x1xf32, #tpu.memory_space<vmem>>, vector<1x8x1xf32>,
      %cst_42 = arith.constant 0.000000e+00 : f32
      %69 = vector.broadcast %cst_42 : f32 to vector<1x8x1xf32>
      %c0_43 = arith.constant 0 : index
      %c0_44 = arith.constant 0 : index
      %c0_45 = arith.constant 0 : index
      %70 = vector.load %arg9[%c0_43, %c0_44, %c0_45] : memref<1x8x1xf32, #tpu.memory_space<vmem>>, vector<1x8x1xf32>
      tpu.vector_store %arg9[%c0_43, %c0_44, %c0_45], %69 {strides = array<i32>} : memref<1x8x1xf32, #tpu.memory_space<vmem>>, vector<1x8x1xf32>,
      %cst_46 = arith.constant 0.000000e+00 : f32
      %71 = vector.broadcast %cst_46 : f32 to vector<1x8x32xf32>
      %c0_47 = arith.constant 0 : index
      %c0_48 = arith.constant 0 : index
      %c0_49 = arith.constant 0 : index
      %72 = vector.load %arg10[%c0_47, %c0_48, %c0_49] : memref<1x8x32xf32, #tpu.memory_space<vmem>>, vector<1x8x32xf32>
      tpu.vector_store %arg10[%c0_47, %c0_48, %c0_49], %71 {strides = array<i32>} : memref<1x8x32xf32, #tpu.memory_space<vmem>>, vector<1x8x32xf32>,
    } else {
    }
    %c0 = arith.constant 0 : index
    %c0_1 = arith.constant 0 : index
    %3 = vector.load %arg2[%c0, %c0_1] : memref<8x32xf32, #tpu.memory_space<vmem>>, vector<8x32xf32>
    %c0_2 = arith.constant 0 : index
    %c0_3 = arith.constant 0 : index
    %4 = vector.load %arg1[%c0_2, %c0_3] : memref<1x8xi32, #tpu.memory_space<vmem>>, vector<1x8xi32>
    %c0_4 = arith.constant 0 : index
    %c0_5 = arith.constant 0 : index
    %5 = vector.load %arg3[%c0_4, %c0_5] : memref<1x32xf32, #tpu.memory_space<vmem>>, vector<1x32xf32>
    %cst = arith.constant dense<0.000000e+00> : vector<1x8xf32>
    %6 = tpu.matmul %5, %3, %cst {dimension_numbers = #tpu.dot_dimension_numbers<[1], [1], [0], [0], [0, 0, 1, 0], [], []>} : vector<1x32xf32>, vector<8x32xf32>, vector<1x8xf32> -> vector<1x8xf32>
    %c0_6 = arith.constant 0 : index
    %c0_7 = arith.constant 0 : index
    %7 = vector.load %arg4[%c0_6, %c0_7] : memref<1x1xf32, #tpu.memory_space<vmem>>, vector<1x1xf32>
    %8 = vector.broadcast %7 : vector<1x1xf32> to vector<1x8xf32>
    %9 = arith.addf %6, %8 : vector<1x8xf32>
    %10 = tpu.iota {dimensions = array<i32: 0>} : vector<8x1xi32>
    %c0_i32_8 = arith.constant 0 : i32
    %11 = vector.broadcast %c0_i32_8 : i32 to vector<8x1xi32>
    %12 = arith.addi %11, %10 : vector<8x1xi32>
    %13 = vector.broadcast %4 : vector<1x8xi32> to vector<8x8xi32>
    %14 = vector.broadcast %12 : vector<8x1xi32> to vector<8x8xi32>
    %15 = arith.cmpi eq, %13, %14 : vector<8x8xi32>
    %c0_9 = arith.constant 0 : index
    %c0_10 = arith.constant 0 : index
    %c0_11 = arith.constant 0 : index
    %16 = vector.load %arg8[%c0_9, %c0_10, %c0_11] : memref<1x8x1xf32, #tpu.memory_space<vmem>>, vector<1x8x1xf32>
    %17 = vector.shape_cast %16 : vector<1x8x1xf32> to vector<8x1xf32>
    %cst_12 = arith.constant -1.000000e+30 : f32
    %18 = vector.shape_cast %9 : vector<1x8xf32> to vector<1x8xf32>
    %19 = vector.broadcast %18 : vector<1x8xf32> to vector<8x8xf32>
    %20 = vector.broadcast %cst_12 : f32 to vector<8x8xf32>
    %21 = arith.select %15, %19, %20 : vector<8x8xi1>, vector<8x8xf32>
    %cst_13 = arith.constant dense<0xFF800000> : vector<8xf32>
    %22 = vector.multi_reduction <maximumf>, %21, %cst_13 [1] : vector<8x8xf32> to vector<8xf32>
    %23 = vector.shape_cast %22 : vector<8xf32> to vector<8x1xf32>
    %24 = arith.maximumf %17, %23 : vector<8x1xf32>
    %25 = arith.subf %17, %24 : vector<8x1xf32>
    %26 = math.exp %25 : vector<8x1xf32>
    %cst_14 = arith.constant -1.000000e+30 : f32
    %27 = vector.shape_cast %24 : vector<8x1xf32> to vector<8x1xf32>
    %28 = vector.broadcast %27 : vector<8x1xf32> to vector<8x8xf32>
    %29 = vector.broadcast %cst_14 : f32 to vector<8x8xf32>
    %30 = arith.select %15, %28, %29 : vector<8x8xi1>, vector<8x8xf32>
    %cst_15 = arith.constant dense<0xFF800000> : vector<8xf32>
    %31 = vector.multi_reduction <maximumf>, %30, %cst_15 [0] : vector<8x8xf32> to vector<8xf32>
    %32 = vector.shape_cast %31 : vector<8xf32> to vector<1x8xf32>
    %cst_16 = arith.constant -5.000000e+29 : f32
    %33 = vector.broadcast %cst_16 : f32 to vector<1x8xf32>
    %34 = arith.cmpf ogt, %32, %33 : vector<1x8xf32>
    %35 = arith.subf %9, %32 : vector<1x8xf32>
    %cst_17 = arith.constant -1.000000e+30 : f32
    %36 = vector.broadcast %cst_17 : f32 to vector<1x8xf32>
    %37 = arith.select %34, %35, %36 : vector<1x8xi1>, vector<1x8xf32>
    %38 = math.exp %37 : vector<1x8xf32>
    %cst_18 = arith.constant 0.000000e+00 : f32
    %39 = vector.shape_cast %38 : vector<1x8xf32> to vector<1x8xf32>
    %40 = vector.broadcast %39 : vector<1x8xf32> to vector<8x8xf32>
    %41 = vector.broadcast %cst_18 : f32 to vector<8x8xf32>
    %42 = arith.select %15, %40, %41 : vector<8x8xi1>, vector<8x8xf32>
    %c0_19 = arith.constant 0 : index
    %c0_20 = arith.constant 0 : index
    %c0_21 = arith.constant 0 : index
    %43 = vector.load %arg9[%c0_19, %c0_20, %c0_21] : memref<1x8x1xf32, #tpu.memory_space<vmem>>, vector<1x8x1xf32>
    %44 = vector.shape_cast %43 : vector<1x8x1xf32> to vector<8x1xf32>
    %45 = arith.mulf %26, %44 : vector<8x1xf32>
    %cst_22 = arith.constant dense<0.000000e+00> : vector<8xf32>
    %46 = vector.multi_reduction <add>, %42, %cst_22 [1] : vector<8x8xf32> to vector<8xf32>
    %47 = vector.shape_cast %46 : vector<8xf32> to vector<8x1xf32>
    %48 = arith.addf %45, %47 : vector<8x1xf32>
    %c0_23 = arith.constant 0 : index
    %c0_24 = arith.constant 0 : index
    %c0_25 = arith.constant 0 : index
    %49 = vector.load %arg9[%c0_23, %c0_24, %c0_25] : memref<1x8x1xf32, #tpu.memory_space<vmem>>, vector<1x8x1xf32>
    %50 = vector.shape_cast %49 : vector<1x8x1xf32> to vector<8x1xf32>
    %51 = vector.shape_cast %48 : vector<8x1xf32> to vector<1x8x1xf32>
    tpu.vector_store %arg9[%c0_23, %c0_24, %c0_25], %51 {strides = array<i32>} : memref<1x8x1xf32, #tpu.memory_space<vmem>>, vector<1x8x1xf32>,
    %c0_26 = arith.constant 0 : index
    %c0_27 = arith.constant 0 : index
    %c0_28 = arith.constant 0 : index
    %52 = vector.load %arg10[%c0_26, %c0_27, %c0_28] : memref<1x8x32xf32, #tpu.memory_space<vmem>>, vector<1x8x32xf32>
    %53 = vector.shape_cast %52 : vector<1x8x32xf32> to vector<8x32xf32>
    %54 = vector.broadcast %26 : vector<8x1xf32> to vector<8x32xf32>
    %55 = arith.mulf %54, %53 : vector<8x32xf32>
    %cst_29 = arith.constant dense<0.000000e+00> : vector<8x32xf32>
    %56 = tpu.matmul %42, %3, %cst_29 {dimension_numbers = #tpu.dot_dimension_numbers<[1], [0], [0], [1], [0, 0, 1, 1], [], []>} : vector<8x8xf32>, vector<8x32xf32>, vector<8x32xf32> -> vector<8x32xf32>
    %57 = arith.addf %55, %56 : vector<8x32xf32>
    %c0_30 = arith.constant 0 : index
    %c0_31 = arith.constant 0 : index
    %c0_32 = arith.constant 0 : index
    %58 = vector.load %arg10[%c0_30, %c0_31, %c0_32] : memref<1x8x32xf32, #tpu.memory_space<vmem>>, vector<1x8x32xf32>
    %59 = vector.shape_cast %58 : vector<1x8x32xf32> to vector<8x32xf32>
    %60 = vector.shape_cast %57 : vector<8x32xf32> to vector<1x8x32xf32>
    tpu.vector_store %arg10[%c0_30, %c0_31, %c0_32], %60 {strides = array<i32>} : memref<1x8x32xf32, #tpu.memory_space<vmem>>, vector<1x8x32xf32>,
    %c0_33 = arith.constant 0 : index
    %c0_34 = arith.constant 0 : index
    %c0_35 = arith.constant 0 : index
    %61 = vector.load %arg8[%c0_33, %c0_34, %c0_35] : memref<1x8x1xf32, #tpu.memory_space<vmem>>, vector<1x8x1xf32>
    %62 = vector.shape_cast %61 : vector<1x8x1xf32> to vector<8x1xf32>
    %63 = vector.shape_cast %24 : vector<8x1xf32> to vector<1x8x1xf32>
    tpu.vector_store %arg8[%c0_33, %c0_34, %c0_35], %63 {strides = array<i32>} : memref<1x8x1xf32, #tpu.memory_space<vmem>>, vector<1x8x1xf32>,
    %c0_i32_36 = arith.constant 0 : i32
    %64 = arith.cmpi eq, %arg0, %c0_i32_36 : i32
    %65 = arith.extui %64 : i1 to i32
    %c0_i32_37 = arith.constant 0 : i32
    %66 = arith.cmpi ne, %65, %c0_i32_37 : i32
    scf.if %66 {
      %c0_38 = arith.constant 0 : index
      %c0_39 = arith.constant 0 : index
      %c0_40 = arith.constant 0 : index
      %67 = vector.load %arg9[%c0_38, %c0_39, %c0_40] : memref<1x8x1xf32, #tpu.memory_space<vmem>>, vector<1x8x1xf32>
      %68 = vector.shape_cast %67 : vector<1x8x1xf32> to vector<8x1xf32>
      %cst_41 = arith.constant 0.000000e+00 : f32
      %69 = vector.broadcast %cst_41 : f32 to vector<8x1xf32>
      %70 = arith.cmpf ogt, %68, %69 : vector<8x1xf32>
      %71 = tpu.reciprocal %68 : vector<8x1xf32> -> vector<8x1xf32>
      %cst_42 = arith.constant 0.000000e+00 : f32
      %72 = vector.broadcast %cst_42 : f32 to vector<8x1xf32>
      %73 = arith.select %70, %71, %72 : vector<8x1xi1>, vector<8x1xf32>
      %c0_43 = arith.constant 0 : index
      %c0_44 = arith.constant 0 : index
      %c0_45 = arith.constant 0 : index
      %74 = vector.load %arg10[%c0_43, %c0_44, %c0_45] : memref<1x8x32xf32, #tpu.memory_space<vmem>>, vector<1x8x32xf32>
      %75 = vector.shape_cast %74 : vector<1x8x32xf32> to vector<8x32xf32>
      %76 = vector.broadcast %73 : vector<8x1xf32> to vector<8x32xf32>
      %77 = arith.mulf %75, %76 : vector<8x32xf32>
      %c0_46 = arith.constant 0 : index
      %c0_47 = arith.constant 0 : index
      %78 = vector.load %arg5[%c0_46, %c0_47] : memref<32x16xf32, #tpu.memory_space<vmem>>, vector<32x16xf32>
      %cst_48 = arith.constant dense<0.000000e+00> : vector<8x16xf32>
      %79 = tpu.matmul %77, %78, %cst_48 {dimension_numbers = #tpu.dot_dimension_numbers<[1], [0], [0], [1], [0, 0, 1, 1], [], []>} : vector<8x32xf32>, vector<32x16xf32>, vector<8x16xf32> -> vector<8x16xf32>
      %c0_49 = arith.constant 0 : index
      %c0_50 = arith.constant 0 : index
      %80 = vector.load %arg6[%c0_49, %c0_50] : memref<1x16xf32, #tpu.memory_space<vmem>>, vector<1x16xf32>
      %81 = vector.broadcast %80 : vector<1x16xf32> to vector<8x16xf32>
      %82 = arith.addf %79, %81 : vector<8x16xf32>
      %c0_51 = arith.constant 0 : index
      %c0_52 = arith.constant 0 : index
      %c0_53 = arith.constant 0 : index
      %83 = vector.load %arg7[%c0_51, %c0_52, %c0_53] : memref<1x8x16xf32, #tpu.memory_space<vmem>>, vector<1x8x16xf32>
      %84 = vector.shape_cast %83 : vector<1x8x16xf32> to vector<8x16xf32>
      %85 = vector.shape_cast %82 : vector<8x16xf32> to vector<1x8x16xf32>
      tpu.vector_store %arg7[%c0_51, %c0_52, %c0_53], %85 {strides = array<i32>} : memref<1x8x16xf32, #tpu.memory_space<vmem>>, vector<1x8x16xf32>,
    } else {
    }
    return
  }
  func.func @transform_0(%arg0: i32) -> (i32, i32) {
    %c0_i32 = arith.constant 0 : i32
    %c0_i32_0 = arith.constant 0 : i32
    return %c0_i32, %arg0 : i32, i32
  }
  func.func @transform_1(%arg0: i32) -> (i32, i32) {
    %c0_i32 = arith.constant 0 : i32
    %c0_i32_0 = arith.constant 0 : i32
    return %arg0, %c0_i32 : i32, i32
  }
  func.func @transform_2(%arg0: i32) -> (i32, i32) {
    %c0_i32 = arith.constant 0 : i32
    %c0_i32_0 = arith.constant 0 : i32
    %c0_i32_1 = arith.constant 0 : i32
    return %c0_i32, %c0_i32_0 : i32, i32
  }
  func.func @transform_3(%arg0: i32) -> (i32, i32) {
    %c0_i32 = arith.constant 0 : i32
    %c0_i32_0 = arith.constant 0 : i32
    %c0_i32_1 = arith.constant 0 : i32
    return %c0_i32, %c0_i32_0 : i32, i32
  }
  func.func @transform_4(%arg0: i32) -> (i32, i32) {
    %c0_i32 = arith.constant 0 : i32
    %c0_i32_0 = arith.constant 0 : i32
    %c0_i32_1 = arith.constant 0 : i32
    return %c0_i32, %c0_i32_0 : i32, i32
  }
  func.func @transform_5(%arg0: i32) -> (i32, i32) {
    %c0_i32 = arith.constant 0 : i32
    %c0_i32_0 = arith.constant 0 : i32
    %c0_i32_1 = arith.constant 0 : i32
    return %c0_i32, %c0_i32_0 : i32, i32
  }
  func.func @transform_6(%arg0: i32) -> (i32, i32, i32) {
    %c0_i32 = arith.constant 0 : i32
    %c0_i32_0 = arith.constant 0 : i32
    %c0_i32_1 = arith.constant 0 : i32
    %c0_i32_2 = arith.constant 0 : i32
    return %c0_i32, %c0_i32_0, %c0_i32_1 : i32, i32, i32
  }
}

</mosaic_0001>

<llo_original>
// kernel: tpu_custom_call.1
$region0: #{tpu_custom_call.1}
  #allocation0 [shape = 'u32[]', space=smem, size = 0x4, offset = 0x4, fixed_abs, tag = 'smem constant byte address 0x4 - core index']
  #allocation1 [shape = 'u32[72,128]{1,0:T(1,128)}', space=vmem, size = 0x9000, scoped, tag = 'internal scratch']
  #allocation2 [shape = 'f32[1,8,1]{2,1,0:T(8,128)}', space=vmem, size = 0x1000, scoped, tag = 'scratch operand']
  #allocation3 [shape = 'f32[1,8,1]{2,1,0:T(8,128)}', space=vmem, size = 0x1000, scoped, tag = 'scratch operand']
  #allocation4 [shape = 'f32[1,8,32]{2,1,0:T(8,128)}', space=vmem, size = 0x1000, scoped, tag = 'scratch operand']
  #allocation5 [shape = 'f32[1,1]{1,0:T(1,128)S(1)}', space=vmem, size = 0x200, scoped, tag = 'scoped memory for tpu_custom_call.1']
  %s0 = inlined_call_operand.vmem [shape: s32[1,8], index: 0, kind: input, shape index: {}]
  %s1 = inlined_call_operand.vmem [shape: f32[8,32], index: 1, kind: input, shape index: {}]
  %s2 = inlined_call_operand.vmem [shape: f32[1,32], index: 2, kind: input, shape index: {}]
  %s3 = inlined_call_operand.<no memory space> [shape: f32[1,1], index: 3, kind: input, shape index: {}]
  %s4 = inlined_call_operand.vmem [shape: f32[32,16], index: 4, kind: input, shape index: {}]
  %s5 = inlined_call_operand.vmem [shape: f32[1,16], index: 5, kind: input, shape index: {}]
  %s6 = inlined_call_operand.hbm [shape: f32[1,8,16], index: 6, kind: output, shape index: {}]
  %s7 = sld [smem:[#allocation0]]
  $region42: #{tpu_custom_call.1} parent=0
    _
  %s9 = ssub.s32 1, %s7
  %s10 = scalar_select 0, %s9, %s7
  %v11 = vstv %s3
  %12 = vst [vmem:[#allocation5] sm:$0x1] %v11
  $region1: #{tpu_custom_call.1} parent=0
    #allocation6 [shape = 'u8[4096]{0}', space=vmem, size = 0x1000, scoped, tag = 'output window, operand 0, single buffered']
    #allocation7 [shape = 's32[1]{0}', space=sflag, size = 0x4, scoped, tag = 'scoped memory for tpu_custom_call.1']
    %13 = vsyncpa [#allocation7], 0
    // Predicated region
    $region2: #{tpu_custom_call.1} parent=1 // pred_check
      _
    $region3: #{tpu_custom_call.1} parent=1 // pred_check_branch
      %15 = sbr.rel (0) target = $region5
    $region4: #{tpu_custom_call.1} parent=1 // pred_region
      _
    $region5: #{tpu_custom_call.1} parent=1 // pred_fallthru
      _
    // Predicated region
    $region6: #{tpu_custom_call.1} parent=1 // pred_check
      _
    $region7: #{tpu_custom_call.1} parent=1 // pred_check_branch
      %17 = sbr.rel (0) target = $region9
    $region8: #{tpu_custom_call.1} parent=1 // pred_region
      _
    $region9: #{tpu_custom_call.1} parent=1 // pred_fallthru
      _
    // Predicated region
    $region10: #{tpu_custom_call.1} parent=1 // pred_check
      _
    $region11: #{tpu_custom_call.1} parent=1 // pred_check_branch
      %19 = sbr.rel (0) target = $region13
    $region12: #{tpu_custom_call.1} parent=1 // pred_region
      _
    $region13: #{tpu_custom_call.1} parent=1 // pred_fallthru
      _
    // Predicated region
    $region14: #{tpu_custom_call.1} parent=1 // pred_check
      _
    $region15: #{tpu_custom_call.1} parent=1 // pred_check_branch
      %21 = sbr.rel (0) target = $region17
    $region16: #{tpu_custom_call.1} parent=1 // pred_region
      _
    $region17: #{tpu_custom_call.1} parent=1 // pred_fallthru
      _
    // Predicated region
    $region18: #{tpu_custom_call.1} parent=1 // pred_check
      _
    $region19: #{tpu_custom_call.1} parent=1 // pred_check_branch
      %23 = sbr.rel (0) target = $region21
    $region20: #{tpu_custom_call.1} parent=1 // pred_region
      _
    $region21: #{tpu_custom_call.1} parent=1 // pred_fallthru
      _
    // Predicated region
    $region22: #{tpu_custom_call.1} parent=1 // pred_check
      _
    $region23: #{tpu_custom_call.1} parent=1 // pred_check_branch
      %25 = sbr.rel (0) target = $region25
    $region24: #{tpu_custom_call.1} parent=1 // pred_region
      _
    $region25: #{tpu_custom_call.1} parent=1 // pred_fallthru
      _
    %p26 = scmp.eq.s32.totalorder 0, 0
    // Predicated region
    $region26: #{tpu_custom_call.1} parent=1 // pred_check
      %p27 = pneg %p26
    $region27: #{tpu_custom_call.1} parent=1 // pred_check_branch
      %29 = sbr.rel (%p27) target = $region29
    $region28: #{tpu_custom_call.1} parent=1 // pred_region
      %vm30 = vcmask 7168
      %31 = vst.msk [vmem:[#allocation2] sm:$0xff] %vm30, -1e+30
      %32 = vst.msk [vmem:[#allocation3] sm:$0xff] %vm30, 0.0
      %vm33 = vcmask 261120
      %34 = vst.msk [vmem:[#allocation4] sm:$0xff] %vm33, 0.0
    $region29: #{tpu_custom_call.1} parent=1 // pred_fallthru
      _
    %v35 = vld [vmem:[%s1] sm:$0xff]
    %v36 = vld [vmem:[%s0] sm:$0x1]
    %v37 = vld [vmem:[%s2] sm:$0x1]
    %v38 = vld [vmem:[#allocation5] sm:$0x1]
    %40 = vset.pattern.permute.xlu0 0
    %41 = vperm.xlu0 %40, %v38
    %v42 = vpop.permute.xlu0 %41
    %v44 = vperm.slane %v42, 0
    %vm45 = vcmask 261120
    %v47 = vsel %vm45, %v37, 0
    %v50 = vsel %vm45, %v35, 0
    %52 = vmatpush.xpose.msra.mxu0 0.0
    %53 = vmatpush.xpose.msra.mxu0 0.0
    %54 = vmatpush.xpose.msra.mxu0 0.0
    %55 = vmatpush.xpose.msra.mxu0 0.0
    %56 = vmatpush.xpose.msra.mxu0 0.0
    %57 = vmatpush.xpose.msra.mxu0 0.0
    %58 = vmatpush.xpose.msra.mxu0 0.0
    %59 = vmatpush.xpose.msra.mxu0 0.0
    %60 = vmatpush.xpose.msra.mxu0 0.0
    %61 = vmatpush.xpose.msra.mxu0 0.0
    %62 = vmatpush.xpose.msra.mxu0 0.0
    %63 = vmatpush.xpose.msra.mxu0 0.0
    %64 = vmatpush.xpose.msra.mxu0 0.0
    %65 = vmatpush.xpose.msra.mxu0 0.0
    %66 = vmatpush.xpose.msra.mxu0 0.0
    %67 = vmatpush.xpose.msra.mxu0 %v50
    %68 = vmatmul.f32.gmra.mxu0 %v47
    %v69 = vpop.f32.mrf.mxu0
    %v70 = vadd.f32 %v44, %v69
    %71 = vdwg.mxu0
    %v72 = vlaneseq
    %v73 = vshrl.u32 %v72, 7
    %v74 = vperm.slane %v36, 0
    %vm75 = vcmp.eq.s32.totalorder %v74, %v73
    %v76 = vld [vmem:[#allocation2] sm:$0xff]
    %v77 = vperm.slane %v70, 0
    %v78 = vsel %vm75, %v77, -1e+30
    %vm79 = vcmask 64512
    %v80 = vsel %vm79, %v78, -inf
    %81 = vmax.xlane.f32.xlu0 %v80
    %v82 = vpop.xlane.xlu0 %81
    %v83 = vmax.f32 %v76, %v82
    %v84 = vsub.f32 %v76, %v83
    %v85 = vmul.f32 %v84, 1.442695
    %v86 = vpow.pop %v85
    %88 = vset.pattern.permute.xlu0 0
    %89 = vperm.xlu0 %88, %v83
    %v90 = vpop.permute.xlu0 %89
    %v92 = vsel %vm75, %v90, -1e+30
    %v93 = vsel %vm79, %v92, -inf
    %v94 = vrot.slane %v93, 4
    %v95 = vmax.f32 %v93, %v94
    %v96 = vrot.slane %v95, 2
    %v97 = vmax.f32 %v95, %v96
    %v98 = vrot.slane %v97, 1
    %v99 = vmax.f32 %v97, %v98
    %vm100 = vcmp.gt.f32.partialorder %v99, -5e+29
    %v101 = vsub.f32 %v70, %v99
    %v102 = vsel %vm100, %v101, -1e+30
    %v103 = vmul.f32 %v102, 1.442695
    %v104 = vpow.pop %v103
    %v105 = vperm.slane %v104, 0
    %v106 = vsel %vm75, %v105, 0.0
    %v107 = vld [vmem:[#allocation3] sm:$0xff]
    %v108 = vmul.f32 %v86, %v107
    %v109 = vsel %vm79, %v106, 0.0
    %110 = vadd.xlane.f32.xlu0 %v109
    %v111 = vpop.xlane.xlu0 %110
    %v112 = vadd.f32 %v108, %v111
    %vm113 = vcmask 7168
    %114 = vst.msk [vmem:[#allocation3] sm:$0xff] %vm113, %v112
    %v115 = vld [vmem:[#allocation4] sm:$0xff]
    %117 = vset.pattern.permute.xlu0 0
    %118 = vperm.xlu0 %117, %v86
    %v119 = vpop.permute.xlu0 %118
    %v121 = vmul.f32 %v119, %v115
    %v123 = vsel %vm79, %v106, 0
    %125 = vmatpush.msra.mxu0 0.0
    %126 = vmatpush.msra.mxu0 0.0
    %127 = vmatpush.msra.mxu0 0.0
    %128 = vmatpush.msra.mxu0 0.0
    %129 = vmatpush.msra.mxu0 0.0
    %130 = vmatpush.msra.mxu0 0.0
    %131 = vmatpush.msra.mxu0 0.0
    %132 = vmatpush.msra.mxu0 0.0
    %133 = vmatpush.msra.mxu0 0.0
    %134 = vmatpush.msra.mxu0 0.0
    %135 = vmatpush.msra.mxu0 0.0
    %136 = vmatpush.msra.mxu0 0.0
    %137 = vmatpush.msra.mxu0 0.0
    %138 = vmatpush.msra.mxu0 0.0
    %139 = vmatpush.msra.mxu0 0.0
    %140 = vmatpush.msra.mxu0 %v35
    %141 = vmatmul.f32.gmra.mxu0 %v123
    %v142 = vpop.f32.mrf.mxu0
    %v143 = vadd.f32 0.0, %v142
    %144 = vdwg.mxu0
    %v145 = vadd.f32 %v121, %v143
    %146 = vst.msk [vmem:[#allocation4] sm:$0xff] %vm45, %v145
    %147 = vst.msk [vmem:[#allocation2] sm:$0xff] %vm113, %v83
    // Predicated region
    $region30: #{tpu_custom_call.1} parent=1 // pred_check
      %p148 = pneg %p26
    $region31: #{tpu_custom_call.1} parent=1 // pred_check_branch
      %150 = sbr.rel (%p148) target = $region33
    $region32: #{tpu_custom_call.1} parent=1 // pred_region
      %v151 = vld [vmem:[#allocation3] sm:$0xff]
      %vm152 = vcmp.gt.f32.partialorder %v151, 0.0
      %v153 = vrcp.pop %v151
      %v154 = vmul.f32 %v151, %v153
      %v155 = vsub.f32 1.0, %v154
      %v156 = vmul.f32 %v153, %v155
      %v157 = vadd.f32 %v153, %v156
      %vm158 = vweird.f32 %v151
      %vm159 = vweird.f32 %v153
      %vm160 = vmor %vm158, %vm159
      %v161 = vsel %vm160, %v153, %v157
      %v162 = vand.u32 2147483647, %v151
      %vm163 = vcmp.eq.f32.partialorder %v162, 8.507059e+37
      %v164 = vand.u32 %v151, 2147483648
      %v165 = vor.u32 1.1754944e-38, %v164
      %v166 = vsel %vm163, %v165, %v161
      %v167 = vsel %vm152, %v166, 0.0
      %v168 = vld [vmem:[#allocation4] sm:$0xff]
      %170 = vset.pattern.permute.xlu0 0
      %171 = vperm.xlu0 %170, %v167
      %v172 = vpop.permute.xlu0 %171
      %v174 = vmul.f32 %v168, %v172
      %v175 = vld [vmem:[%s4] sm:$0xff]
      %v176 = vld [vmem:[%s4 + $0x8] sm:$0xff]
      %v177 = vld [vmem:[%s4 + $0x10] sm:$0xff]
      %v178 = vld [vmem:[%s4 + $0x18] sm:$0xff]
      %v179 = vld [vmem:[%s5] sm:$0x1]
      %v181 = vperm.slane %v179, 0
      %v184 = vsel %vm45, %v174, 0
      %186 = vmatpush.msra.mxu0 0.0
      %187 = vmatpush.msra.mxu0 0.0
      %188 = vmatpush.msra.mxu0 0.0
      %189 = vmatpush.msra.mxu0 0.0
      %190 = vmatpush.msra.mxu0 0.0
      %191 = vmatpush.msra.mxu0 0.0
      %192 = vmatpush.msra.mxu0 0.0
      %193 = vmatpush.msra.mxu0 0.0
      %194 = vmatpush.msra.mxu0 0.0
      %195 = vmatpush.msra.mxu0 0.0
      %196 = vmatpush.msra.mxu0 0.0
      %197 = vmatpush.msra.mxu0 0.0
      %198 = vmatpush.msra.mxu0 %v178
      %199 = vmatpush.msra.mxu0 %v177
      %200 = vmatpush.msra.mxu0 %v176
      %201 = vmatpush.msra.mxu0 %v175
      %202 = vmatmul.f32.gmra.mxu0 %v184
      %v203 = vpop.f32.mrf.mxu0
      %v204 = vadd.f32 %v181, %v203
      %205 = vdwg.mxu0
      %vm206 = vcmask 130048
      %207 = vst.msk [vmem:[#allocation6] sm:$0xff] %vm206, %v204
    $region33: #{tpu_custom_call.1} parent=1 // pred_fallthru
      _
    // Predicated region
    $region34: #{tpu_custom_call.1} parent=1 // pred_check
      _
    $region35: #{tpu_custom_call.1} parent=1 // pred_check_branch
      %209 = sbr.rel (0) target = $region37
    $region36: #{tpu_custom_call.1} parent=1 // pred_region
      %211 = vsyncadd [#allocation7], 0
      %s213 = sshll.u32 [#allocation6], 4
      %s214 = int_to_ptr.vmem [resolvable:$true] %s213
      %s215 = sshll.u32 %s6, 4
      %s216 = int_to_ptr.hbm [resolvable:$true] %s215
      %218 = dma.vmem_to_hbm [thread:$0]  %s214, 128, %s216, [#allocation7]
    $region37: #{tpu_custom_call.1} parent=1 // pred_fallthru
      _
    // Predicated region
    $region38: #{tpu_custom_call.1} parent=1 // pred_check
      _
    $region39: #{tpu_custom_call.1} parent=1 // pred_check_branch
      %220 = sbr.rel (0) target = $region41
    $region40: #{tpu_custom_call.1} parent=1 // pred_region
      %222 = dma.done [#allocation7], 128
    $region41: #{tpu_custom_call.1} parent=1 // pred_fallthru
      _
    %223 = vsyncpa [#allocation7], 1

</llo_original>
